<compile_context>
chip_gen: v6e
topology: v6e:2x2x1
jax: 0.10.0
libtpu: 0.0.40
codegen_flags: <defaults>
</compile_context>

<pallas_src>
import jax
import jax.numpy as jnp
from jax import lax
from jax.experimental import pallas as pl
from jax.experimental.pallas import tpu as pltpu


def sba_kernel(xq_ref, xkv_ref, wq_ref, bq_ref, wvk_ref, bvk_ref, g_ref, o_ref):
    # xq_ref  : (1, C, TQ)   query-column slice of x (channels on sublanes)
    # xkv_ref : (1, C, N)    full x of this batch (keys / values)
    # wq_ref  : (Cr, C)      query 1x1x1 conv weight
    # bq_ref  : (Cr, 1)
    # wvk_ref : (C + Cr, C)  fused [Wv; Wk]
    # bvk_ref : (C + Cr, 1)  fused [bv; bk]
    # g_ref   : (1,)         gamma, in SMEM
    # o_ref   : (1, C, TQ)
    C = xq_ref.shape[1]

    x_q = xq_ref[0]      # (C, TQ) f32
    x_kv = xkv_ref[0]    # (C, N)  f32

    # ---- 1x1x1 convolutions as channel matmuls (MXU); K/V fused ----------
    q = jnp.dot(wq_ref[...], x_q,
                preferred_element_type=jnp.float32) + bq_ref[...]       # (Cr, TQ)
    vk = jnp.dot(wvk_ref[...], x_kv,
                 preferred_element_type=jnp.float32) + bvk_ref[...]     # (C+Cr, N)
    v = vk[:C, :]                                                        # (C, N)
    k = vk[C:, :]                                                        # (Cr, N)

    # ---- energy[m, t] = <k[:, m], q[:, t]>  (keys on sublanes, queries on lanes)
    energy = lax.dot_general(
        k.astype(jnp.bfloat16), q.astype(jnp.bfloat16),
        (((0,), (0,)), ((), ())),
        preferred_element_type=jnp.float32)                              # (N, TQ)

    # ---- softmax over keys (axis 0), normalization deferred ---------------
    e_max = jnp.max(energy, axis=0, keepdims=True)                       # (1, TQ)
    p = jnp.exp(energy - e_max)                                          # (N, TQ)
    denom = jnp.sum(p, axis=0, keepdims=True)                            # (1, TQ)

    # ---- value aggregation: out_u[c, t] = sum_m v[c, m] * p[m, t] ---------
    out_u = jnp.dot(v.astype(jnp.bfloat16), p.astype(jnp.bfloat16),
                    preferred_element_type=jnp.float32)                  # (C, TQ)

    inv = pl.reciprocal(denom, approx=True)                              # (1, TQ), EUP
    o_ref[0] = g_ref[0] * (out_u * inv) + x_q


def sba_block_3d(x, params, *, tq=None):
    """x: (B, C, D, W, H) float32 -> (B, C, D, W, H) float32."""
    B, C, D, W, H = x.shape
    N = D * W * H
    Cr = params["wq"].shape[0]

    # Query-tile size: lane-dense multiple of 128 when it divides N, else full N.
    if tq is None:
        for cand in (512, 256, 128):
            if N % cand == 0:
                tq = cand
                break
        else:
            tq = N  # TODO(synk): pad ragged N to a tile multiple for big volumes
    num_q = N // tq

    # Flatten spatial dims only — keep channels-first, no transpose.
    xf = x.reshape(B, C, N).astype(jnp.float32)                          # (B, C, N)

    wq = params["wq"].astype(jnp.float32)                                # (Cr, C)
    bq = params["bq"].reshape(Cr, 1).astype(jnp.float32)
    wvk = jnp.concatenate(
        [params["wv"], params["wk"]], axis=0).astype(jnp.float32)        # (C+Cr, C)
    bvk = jnp.concatenate(
        [params["bv"], params["bk"]], axis=0).reshape(C + Cr, 1).astype(jnp.float32)
    gamma = params["gamma"].reshape(1).astype(jnp.float32)               # (1,)

    out_flat = pl.pallas_call(
        sba_kernel,
        out_shape=jax.ShapeDtypeStruct((B, C, N), jnp.float32),
        grid=(B, num_q),
        in_specs=[
            pl.BlockSpec((1, C, tq), lambda b, qi: (b, 0, qi)),      # x query cols
            pl.BlockSpec((1, C, N), lambda b, qi: (b, 0, 0)),        # x full (K/V)
            pl.BlockSpec((Cr, C), lambda b, qi: (0, 0)),             # Wq
            pl.BlockSpec((Cr, 1), lambda b, qi: (0, 0)),             # bq
            pl.BlockSpec((C + Cr, C), lambda b, qi: (0, 0)),         # [Wv; Wk]
            pl.BlockSpec((C + Cr, 1), lambda b, qi: (0, 0)),         # [bv; bk]
            pl.BlockSpec(memory_space=pltpu.MemorySpace.SMEM),       # gamma (scalar)
        ],
        out_specs=pl.BlockSpec((1, C, tq), lambda b, qi: (b, 0, qi)),
        compiler_params=pltpu.CompilerParams(
            dimension_semantics=("parallel", "parallel"),
            vmem_limit_bytes=32 * 1024 * 1024),
    )(xf, xf, wq, bq, wvk, bvk, gamma)

    return out_flat.reshape(B, C, D, W, H)


def sba_block_3d_ref(x, params):
    """Pure-JAX reference mirroring the PyTorch forward (f32)."""
    B, C, D, W, H = x.shape
    N = D * W * H
    xf = x.reshape(B, C, N)

    def conv1(w, b):
        return jnp.einsum('bcn,oc->bon', xf, w) + b[None, :, None]

    q = jnp.transpose(conv1(params["wq"], params["bq"]), (0, 2, 1))  # (B, N, Cr)
    k = conv1(params["wk"], params["bk"])                            # (B, Cr, N)
    energy = jnp.einsum('bnc,bcm->bnm', q, k)                        # (B, N, N)
    attn = jax.nn.softmax(energy, axis=-1)
    v = conv1(params["wv"], params["bv"])                            # (B, C, N)
    out = jnp.einsum('bcm,bnm->bcn', v, attn)                        # (B, C, N)
    out = out.reshape(B, C, D, W, H)
    return params["gamma"] * out + x


if __name__ == "__main__":
    # Small shapes consistent with the module: in_channel=8, r=2 -> Cr=4,
    # volume 4x4x4 -> N=64, batch=2.
    B, C, D, W, H = 2, 8, 4, 4, 4
    r = 2
    Cr = C // r

    key = jax.random.PRNGKey(0)
    kx, kq, kk, kv, kbq, kbk, kbv = jax.random.split(key, 7)

    x = jax.random.normal(kx, (B, C, D, W, H), dtype=jnp.float32)

    # Deterministic parameter init (Conv3d 1x1x1 weights reshaped to 2D).
    # gamma is a Parameter initialized to zero in the module; use a nonzero
    # value here so the attention path is actually exercised.
    params = {
        "wq": jax.random.normal(kq, (Cr, C), dtype=jnp.float32) * 0.1,
        "bq": jax.random.normal(kbq, (Cr,), dtype=jnp.float32) * 0.1,
        "wk": jax.random.normal(kk, (Cr, C), dtype=jnp.float32) * 0.1,
        "bk": jax.random.normal(kbk, (Cr,), dtype=jnp.float32) * 0.1,
        "wv": jax.random.normal(kv, (C, C), dtype=jnp.float32) * 0.1,
        "bv": jax.random.normal(kbv, (C,), dtype=jnp.float32) * 0.1,
        "gamma": jnp.array(0.5, dtype=jnp.float32),
    }

    out = sba_block_3d(x, params)
    out = jax.block_until_ready(out)

    ref = sba_block_3d_ref(x, params)
    assert out.shape == (B, C, D, W, H)
    # bf16 MXU operands + approx reciprocal -> relaxed tolerance vs f32 reference.
    assert jnp.allclose(out, ref, atol=3e-2, rtol=3e-2), "mismatch vs reference"

    print("KERNEL_OK")
</pallas_src>

<mosaic_0001>
module attributes {stable_mosaic.version = 11 : i64} {
  func.func @sba_kernel(%arg0: i32, %arg1: i32, %arg2: memref<1x8x64xf32, #tpu.memory_space<vmem>>, %arg3: memref<1x8x64xf32, #tpu.memory_space<vmem>>, %arg4: memref<4x8xf32, #tpu.memory_space<vmem>>, %arg5: memref<4x1xf32, #tpu.memory_space<vmem>>, %arg6: memref<12x8xf32, #tpu.memory_space<vmem>>, %arg7: memref<12x1xf32, #tpu.memory_space<vmem>>, %arg8: memref<1xf32, #tpu.memory_space<smem>>, %arg9: memref<1x8x64xf32, #tpu.memory_space<vmem>>) attributes {dimension_semantics = [#tpu.dimension_semantics<parallel>, #tpu.dimension_semantics<parallel>], iteration_bounds = array<i64: 2, 1>, scalar_prefetch = 0 : i64, scratch_operands = 0 : i64, tpu.core_type = #tpu.core_type<tc>, window_params = [{transform_indices = @transform_0, window_bounds = array<i64: 1, 8, 64>}, {transform_indices = @transform_1, window_bounds = array<i64: 1, 8, 64>}, {pipeline_mode = #tpu.pipeline_mode<synchronous>, transform_indices = @transform_2, window_bounds = array<i64: 4, 8>}, {pipeline_mode = #tpu.pipeline_mode<synchronous>, transform_indices = @transform_3, window_bounds = array<i64: 4, 1>}, {pipeline_mode = #tpu.pipeline_mode<synchronous>, transform_indices = @transform_4, window_bounds = array<i64: 12, 8>}, {pipeline_mode = #tpu.pipeline_mode<synchronous>, transform_indices = @transform_5, window_bounds = array<i64: 12, 1>}, {transform_indices = @transform_6, window_bounds = array<i64: 1>}, {transform_indices = @transform_7, window_bounds = array<i64: 1, 8, 64>}]} {
    %c0 = arith.constant 0 : index
    %c0_0 = arith.constant 0 : index
    %c0_1 = arith.constant 0 : index
    %0 = vector.load %arg2[%c0, %c0_0, %c0_1] : memref<1x8x64xf32, #tpu.memory_space<vmem>>, vector<1x8x64xf32>
    %1 = vector.shape_cast %0 : vector<1x8x64xf32> to vector<8x64xf32>
    %c0_2 = arith.constant 0 : index
    %c0_3 = arith.constant 0 : index
    %c0_4 = arith.constant 0 : index
    %2 = vector.load %arg3[%c0_2, %c0_3, %c0_4] : memref<1x8x64xf32, #tpu.memory_space<vmem>>, vector<1x8x64xf32>
    %3 = vector.shape_cast %2 : vector<1x8x64xf32> to vector<8x64xf32>
    %c0_5 = arith.constant 0 : index
    %c0_6 = arith.constant 0 : index
    %4 = vector.load %arg4[%c0_5, %c0_6] : memref<4x8xf32, #tpu.memory_space<vmem>>, vector<4x8xf32>
    %cst = arith.constant dense<0.000000e+00> : vector<4x64xf32>
    %5 = tpu.matmul %4, %1, %cst {dimension_numbers = #tpu.dot_dimension_numbers<[1], [0], [0], [1], [0, 0, 1, 1], [], []>} : vector<4x8xf32>, vector<8x64xf32>, vector<4x64xf32> -> vector<4x64xf32>
    %c0_7 = arith.constant 0 : index
    %c0_8 = arith.constant 0 : index
    %6 = vector.load %arg5[%c0_7, %c0_8] : memref<4x1xf32, #tpu.memory_space<vmem>>, vector<4x1xf32>
    %7 = vector.broadcast %6 : vector<4x1xf32> to vector<4x64xf32>
    %8 = arith.addf %5, %7 : vector<4x64xf32>
    %c0_9 = arith.constant 0 : index
    %c0_10 = arith.constant 0 : index
    %9 = vector.load %arg6[%c0_9, %c0_10] : memref<12x8xf32, #tpu.memory_space<vmem>>, vector<12x8xf32>
    %cst_11 = arith.constant dense<0.000000e+00> : vector<12x64xf32>
    %10 = tpu.matmul %9, %3, %cst_11 {dimension_numbers = #tpu.dot_dimension_numbers<[1], [0], [0], [1], [0, 0, 1, 1], [], []>} : vector<12x8xf32>, vector<8x64xf32>, vector<12x64xf32> -> vector<12x64xf32>
    %c0_12 = arith.constant 0 : index
    %c0_13 = arith.constant 0 : index
    %11 = vector.load %arg7[%c0_12, %c0_13] : memref<12x1xf32, #tpu.memory_space<vmem>>, vector<12x1xf32>
    %12 = vector.broadcast %11 : vector<12x1xf32> to vector<12x64xf32>
    %13 = arith.addf %10, %12 : vector<12x64xf32>
    %14 = vector.extract_strided_slice %13 {offsets = [0, 0], sizes = [8, 64], strides = [1, 1]} : vector<12x64xf32> to vector<8x64xf32>
    %15 = vector.extract_strided_slice %13 {offsets = [8, 0], sizes = [4, 64], strides = [1, 1]} : vector<12x64xf32> to vector<4x64xf32>
    %16 = arith.truncf %15 : vector<4x64xf32> to vector<4x64xbf16>
    %17 = arith.truncf %8 : vector<4x64xf32> to vector<4x64xbf16>
    %cst_14 = arith.constant dense<0.000000e+00> : vector<64x64xf32>
    %18 = tpu.matmul %16, %17, %cst_14 {dimension_numbers = #tpu.dot_dimension_numbers<[0], [0], [1], [1], [0, 1, 1, 1], [], []>} : vector<4x64xbf16>, vector<4x64xbf16>, vector<64x64xf32> -> vector<64x64xf32>
    %cst_15 = arith.constant dense<0xFF800000> : vector<64xf32>
    %19 = vector.multi_reduction <maximumf>, %18, %cst_15 [0] : vector<64x64xf32> to vector<64xf32>
    %20 = vector.shape_cast %19 : vector<64xf32> to vector<1x64xf32>
    %21 = vector.broadcast %20 : vector<1x64xf32> to vector<64x64xf32>
    %22 = arith.subf %18, %21 : vector<64x64xf32>
    %23 = math.exp %22 : vector<64x64xf32>
    %cst_16 = arith.constant dense<0.000000e+00> : vector<64xf32>
    %24 = vector.multi_reduction <add>, %23, %cst_16 [0] : vector<64x64xf32> to vector<64xf32>
    %25 = vector.shape_cast %24 : vector<64xf32> to vector<1x64xf32>
    %26 = arith.truncf %14 : vector<8x64xf32> to vector<8x64xbf16>
    %27 = arith.truncf %23 : vector<64x64xf32> to vector<64x64xbf16>
    %cst_17 = arith.constant dense<0.000000e+00> : vector<8x64xf32>
    %28 = tpu.matmul %26, %27, %cst_17 {dimension_numbers = #tpu.dot_dimension_numbers<[1], [0], [0], [1], [0, 0, 1, 1], [], []>} : vector<8x64xbf16>, vector<64x64xbf16>, vector<8x64xf32> -> vector<8x64xf32>
    %29 = tpu.reciprocal %25 {approx = true} : vector<1x64xf32> -> vector<1x64xf32>
    %c0_18 = arith.constant 0 : index
    %30 = memref.load %arg8[%c0_18] : memref<1xf32, #tpu.memory_space<smem>>
    %31 = vector.broadcast %29 : vector<1x64xf32> to vector<8x64xf32>
    %32 = arith.mulf %28, %31 : vector<8x64xf32>
    %33 = vector.broadcast %30 : f32 to vector<8x64xf32>
    %34 = arith.mulf %33, %32 : vector<8x64xf32>
    %35 = arith.addf %34, %1 : vector<8x64xf32>
    %c0_19 = arith.constant 0 : index
    %c0_20 = arith.constant 0 : index
    %c0_21 = arith.constant 0 : index
    %36 = vector.load %arg9[%c0_19, %c0_20, %c0_21] : memref<1x8x64xf32, #tpu.memory_space<vmem>>, vector<1x8x64xf32>
    %37 = vector.shape_cast %36 : vector<1x8x64xf32> to vector<8x64xf32>
    %38 = vector.shape_cast %35 : vector<8x64xf32> to vector<1x8x64xf32>
    tpu.vector_store %arg9[%c0_19, %c0_20, %c0_21], %38 {strides = array<i32>} : memref<1x8x64xf32, #tpu.memory_space<vmem>>, vector<1x8x64xf32>,
    return
  }
  func.func @transform_0(%arg0: i32, %arg1: i32) -> (i32, i32, i32) {
    %c0_i32 = arith.constant 0 : i32
    %c0_i32_0 = arith.constant 0 : i32
    return %arg0, %c0_i32, %arg1 : i32, i32, i32
  }
  func.func @transform_1(%arg0: i32, %arg1: i32) -> (i32, i32, i32) {
    %c0_i32 = arith.constant 0 : i32
    %c0_i32_0 = arith.constant 0 : i32
    %c0_i32_1 = arith.constant 0 : i32
    return %arg0, %c0_i32, %c0_i32_0 : i32, i32, i32
  }
  func.func @transform_2(%arg0: i32, %arg1: i32) -> (i32, i32) {
    %c0_i32 = arith.constant 0 : i32
    %c0_i32_0 = arith.constant 0 : i32
    %c0_i32_1 = arith.constant 0 : i32
    return %c0_i32, %c0_i32_0 : i32, i32
  }
  func.func @transform_3(%arg0: i32, %arg1: i32) -> (i32, i32) {
    %c0_i32 = arith.constant 0 : i32
    %c0_i32_0 = arith.constant 0 : i32
    %c0_i32_1 = arith.constant 0 : i32
    return %c0_i32, %c0_i32_0 : i32, i32
  }
  func.func @transform_4(%arg0: i32, %arg1: i32) -> (i32, i32) {
    %c0_i32 = arith.constant 0 : i32
    %c0_i32_0 = arith.constant 0 : i32
    %c0_i32_1 = arith.constant 0 : i32
    return %c0_i32, %c0_i32_0 : i32, i32
  }
  func.func @transform_5(%arg0: i32, %arg1: i32) -> (i32, i32) {
    %c0_i32 = arith.constant 0 : i32
    %c0_i32_0 = arith.constant 0 : i32
    %c0_i32_1 = arith.constant 0 : i32
    return %c0_i32, %c0_i32_0 : i32, i32
  }
  func.func @transform_6(%arg0: i32, %arg1: i32) -> i32 {
    %c0_i32 = arith.constant 0 : i32
    %c0_i32_0 = arith.constant 0 : i32
    return %c0_i32 : i32
  }
  func.func @transform_7(%arg0: i32, %arg1: i32) -> (i32, i32, i32) {
    %c0_i32 = arith.constant 0 : i32
    %c0_i32_0 = arith.constant 0 : i32
    return %arg0, %c0_i32, %arg1 : i32, i32, i32
  }
}

</mosaic_0001>

<llo_original>
// kernel: tpu_custom_call.1
$region0: #{tpu_custom_call.1}
  #allocation0 [shape = 'u32[]', space=smem, size = 0x4, offset = 0x4, fixed_abs, tag = 'smem constant byte address 0x4 - core index']
  #allocation1 [shape = 'u32[144,128]{1,0:T(1,128)}', space=vmem, size = 0x12000, scoped, tag = 'internal scratch']
  #allocation2 [shape = 'f32[1]{0:T(128)S(6)}', space=smem, size = 0x200, scoped, tag = 'scoped memory for tpu_custom_call.1']
  %s0 = inlined_call_operand.vmem [shape: f32[2,8,64], index: 0, kind: input, shape index: {}]
  %s1 = inlined_call_operand.vmem [shape: f32[2,8,64], index: 1, kind: input, shape index: {}]
  %s2 = inlined_call_operand.vmem [shape: f32[4,8], index: 2, kind: input, shape index: {}]
  %s3 = inlined_call_operand.vmem [shape: f32[4,1], index: 3, kind: input, shape index: {}]
  %s4 = inlined_call_operand.vmem [shape: f32[12,8], index: 4, kind: input, shape index: {}]
  %s5 = inlined_call_operand.vmem [shape: f32[12,1], index: 5, kind: input, shape index: {}]
  %s6 = inlined_call_operand.<no memory space> [shape: f32[1], index: 6, kind: input, shape index: {}]
  %s7 = inlined_call_operand.hbm [shape: f32[2,8,64], index: 7, kind: output, shape index: {}]
  %s8 = sld [smem:[#allocation0]]
  $region61: #{tpu_custom_call.1} parent=0
    _
  %s10 = ssub.s32 1, %s8
  %s11 = scalar_select 0, %s10, %s8
  %12 = sst [smem:[#allocation2]] %s6
  $region1: #{tpu_custom_call.1} parent=0
    #allocation3 [shape = 'u8[8192]{0}', space=vmem, size = 0x2000, scoped, tag = 'output window, operand 0']
    #allocation4 [shape = 's32[2]{0}', space=sflag, size = 0x8, scoped, tag = 'scoped memory for tpu_custom_call.1']
    %13 = vsyncpa [#allocation4], 0
    %s14 = scalar_lea.sflag [#allocation4], 1
    %15 = vsyncpa %s14, 0
    loop: start=0, step=1, limit=4
    $region2: #{tpu_custom_call.1} parent=1 // loop_pre_header
      _
    $region3: #{tpu_custom_call.1} parent=1 // loop_header
      %s17 = sphi 0, %s21
      %p18 = scmp.ge.s32.totalorder %s17, 4
      %s24 = sphi 0, %s36
      %s25 = sphi 0, %s32
      %s26 = sphi 0, %s24
      %s27 = sphi 0, %s25
      %s28 = sphi 0, %s26
      %s29 = sphi 0, %s27
      %s41 = sphi 0, %s43
      %s44 = sphi 0, %s41
      %s45 = sphi 0, %s44
      %s61 = sphi 0, %s45
      %s67 = sphi 0, %s69
      %s70 = sphi 0, %s67
      %s71 = sphi 0, %s70
      %s87 = sphi 0, %s71
      %s91 = sphi 0, %s91
      %s93 = sphi 0, %s91
      %s94 = sphi 0, %s93
      %s108 = sphi 0, %s94
      %s112 = sphi 0, %s112
      %s114 = sphi 0, %s112
      %s115 = sphi 0, %s114
      %s129 = sphi 0, %s115
      %s133 = sphi 0, %s133
      %s135 = sphi 0, %s133
      %s136 = sphi 0, %s135
      %s150 = sphi 0, %s136
      %s154 = sphi 0, %s154
      %s156 = sphi 0, %s154
      %s157 = sphi 0, %s156
      %s171 = sphi 0, %s157
      %s175 = sphi 0, %s175
      %s177 = sphi 0, %s175
      %s178 = sphi 0, %s177
      %s192 = sphi 0, %s178
      %s200 = sphi 0, %s202
      %s203 = sphi 0, %s200
      %s204 = sphi 0, %s203
      %s220 = sphi 0, %s204
    $region4: #{tpu_custom_call.1} parent=1 // loop_header_branch
      %20 = sbr.rel (%p18) target = $region8
    $region5: #{tpu_custom_call.1} parent=1 // loop_body
      %s22 = ssub.s32 %s17, 1
      %s23 = ssub.s32 %s17, 2
      %s30 = sadd.s32 1, %s25
      %p31 = scmp.ge.s32.totalorder %s30, 1
      %s32 = scalar_select %p31, 0, %s30
      %s33 = sadd.s32 1, %s24
      %s34 = scalar_select %p31, %s33, %s24
      %p35 = scmp.ge.s32.totalorder %s34, 2
      %s36 = scalar_select %p35, 0, %s34
      %s37 = ssub.s32 %s24, %s36
      %s38 = ssub.s32 %s25, %s32
      %s39 = sor.u32 %s37, %s38
      %p40 = scmp.eq.s32.totalorder %s39, 0
      %s42 = sadd.s32 %s41, 1
      %s43 = scalar_select %p40, %s41, %s42
      %p46 = pneg %p40
      %p47 = scmp.eq.s32.totalorder %s17, 1
      %p48 = por %p46, %p47
      %p49 = scmp.ne.s32.totalorder %s41, %s44
      %p50 = scmp.eq.s32.totalorder %s17, 0
      %p51 = por %p49, %p50
      %p52 = scmp.ne.s32.totalorder %s41, %s44
      %p53 = scmp.eq.s32.totalorder %s22, 1
      %p54 = por %p52, %p53
      %p55 = scmp.ne.s32.totalorder %s44, %s45
      %p56 = scmp.eq.s32.totalorder %s22, 0
      %p57 = por %p55, %p56
      %p58 = scmp.ne.s32.totalorder %s44, %s45
      %p59 = scmp.eq.s32.totalorder %s23, 1
      %p60 = por %p58, %p59
      %p62 = scmp.ne.s32.totalorder %s45, %s61
      %p63 = scmp.eq.s32.totalorder %s23, 0
      %p64 = por %p62, %p63
      %s65 = ssub.s32 %s24, %s36
      %p66 = scmp.eq.s32.totalorder %s65, 0
      %s68 = sadd.s32 %s67, 1
      %s69 = scalar_select %p66, %s67, %s68
      %p72 = pneg %p66
      %p73 = scmp.eq.s32.totalorder %s17, 1
      %p74 = por %p72, %p73
      %p75 = scmp.ne.s32.totalorder %s67, %s70
      %p76 = scmp.eq.s32.totalorder %s17, 0
      %p77 = por %p75, %p76
      %p78 = scmp.ne.s32.totalorder %s67, %s70
      %p79 = scmp.eq.s32.totalorder %s22, 1
      %p80 = por %p78, %p79
      %p81 = scmp.ne.s32.totalorder %s70, %s71
      %p82 = scmp.eq.s32.totalorder %s22, 0
      %p83 = por %p81, %p82
      %p84 = scmp.ne.s32.totalorder %s70, %s71
      %p85 = scmp.eq.s32.totalorder %s23, 1
      %p86 = por %p84, %p85
      %p88 = scmp.ne.s32.totalorder %s71, %s87
      %p89 = scmp.eq.s32.totalorder %s23, 0
      %p90 = por %p88, %p89
      %s92 = sadd.s32 %s91, 1
      %p95 = scmp.eq.s32.totalorder %s17, 1
      %p96 = scmp.ne.s32.totalorder %s91, %s93
      %p97 = scmp.eq.s32.totalorder %s17, 0
      %p98 = por %p96, %p97
      %p99 = scmp.ne.s32.totalorder %s91, %s93
      %p100 = scmp.eq.s32.totalorder %s22, 1
      %p101 = por %p99, %p100
      %p102 = scmp.ne.s32.totalorder %s93, %s94
      %p103 = scmp.eq.s32.totalorder %s22, 0
      %p104 = por %p102, %p103
      %p105 = scmp.ne.s32.totalorder %s93, %s94
      %p106 = scmp.eq.s32.totalorder %s23, 1
      %p107 = por %p105, %p106
      %p109 = scmp.ne.s32.totalorder %s94, %s108
      %p110 = scmp.eq.s32.totalorder %s23, 0
      %p111 = por %p109, %p110
      %s113 = sadd.s32 %s112, 1
      %p116 = scmp.eq.s32.totalorder %s17, 1
      %p117 = scmp.ne.s32.totalorder %s112, %s114
      %p118 = scmp.eq.s32.totalorder %s17, 0
      %p119 = por %p117, %p118
      %p120 = scmp.ne.s32.totalorder %s112, %s114
      %p121 = scmp.eq.s32.totalorder %s22, 1
      %p122 = por %p120, %p121
      %p123 = scmp.ne.s32.totalorder %s114, %s115
      %p124 = scmp.eq.s32.totalorder %s22, 0
      %p125 = por %p123, %p124
      %p126 = scmp.ne.s32.totalorder %s114, %s115
      %p127 = scmp.eq.s32.totalorder %s23, 1
      %p128 = por %p126, %p127
      %p130 = scmp.ne.s32.totalorder %s115, %s129
      %p131 = scmp.eq.s32.totalorder %s23, 0
      %p132 = por %p130, %p131
      %s134 = sadd.s32 %s133, 1
      %p137 = scmp.eq.s32.totalorder %s17, 1
      %p138 = scmp.ne.s32.totalorder %s133, %s135
      %p139 = scmp.eq.s32.totalorder %s17, 0
      %p140 = por %p138, %p139
      %p141 = scmp.ne.s32.totalorder %s133, %s135
      %p142 = scmp.eq.s32.totalorder %s22, 1
      %p143 = por %p141, %p142
      %p144 = scmp.ne.s32.totalorder %s135, %s136
      %p145 = scmp.eq.s32.totalorder %s22, 0
      %p146 = por %p144, %p145
      %p147 = scmp.ne.s32.totalorder %s135, %s136
      %p148 = scmp.eq.s32.totalorder %s23, 1
      %p149 = por %p147, %p148
      %p151 = scmp.ne.s32.totalorder %s136, %s150
      %p152 = scmp.eq.s32.totalorder %s23, 0
      %p153 = por %p151, %p152
      %s155 = sadd.s32 %s154, 1
      %p158 = scmp.eq.s32.totalorder %s17, 1
      %p159 = scmp.ne.s32.totalorder %s154, %s156
      %p160 = scmp.eq.s32.totalorder %s17, 0
      %p161 = por %p159, %p160
      %p162 = scmp.ne.s32.totalorder %s154, %s156
      %p163 = scmp.eq.s32.totalorder %s22, 1
      %p164 = por %p162, %p163
      %p165 = scmp.ne.s32.totalorder %s156, %s157
      %p166 = scmp.eq.s32.totalorder %s22, 0
      %p167 = por %p165, %p166
      %p168 = scmp.ne.s32.totalorder %s156, %s157
      %p169 = scmp.eq.s32.totalorder %s23, 1
      %p170 = por %p168, %p169
      %p172 = scmp.ne.s32.totalorder %s157, %s171
      %p173 = scmp.eq.s32.totalorder %s23, 0
      %p174 = por %p172, %p173
      %s176 = sadd.s32 %s175, 1
      %p179 = scmp.eq.s32.totalorder %s17, 1
      %p180 = scmp.ne.s32.totalorder %s175, %s177
      %p181 = scmp.eq.s32.totalorder %s17, 0
      %p182 = por %p180, %p181
      %p183 = scmp.ne.s32.totalorder %s175, %s177
      %p184 = scmp.eq.s32.totalorder %s22, 1
      %p185 = por %p183, %p184
      %p186 = scmp.ne.s32.totalorder %s177, %s178
      %p187 = scmp.eq.s32.totalorder %s22, 0
      %p188 = por %p186, %p187
      %p189 = scmp.ne.s32.totalorder %s177, %s178
      %p190 = scmp.eq.s32.totalorder %s23, 1
      %p191 = por %p189, %p190
      %p193 = scmp.ne.s32.totalorder %s178, %s192
      %p194 = scmp.eq.s32.totalorder %s23, 0
      %p195 = por %p193, %p194
      %s196 = ssub.s32 %s24, %s36
      %s197 = ssub.s32 %s25, %s32
      %s198 = sor.u32 %s196, %s197
      %p199 = scmp.eq.s32.totalorder %s198, 0
      %s201 = sadd.s32 %s200, 1
      %s202 = scalar_select %p199, %s200, %s201
      %p205 = pneg %p199
      %p206 = scmp.eq.s32.totalorder %s17, 1
      %p207 = por %p205, %p206
      %p208 = scmp.ne.s32.totalorder %s200, %s203
      %p209 = scmp.eq.s32.totalorder %s17, 0
      %p210 = por %p208, %p209
      %p211 = scmp.ne.s32.totalorder %s200, %s203
      %p212 = scmp.eq.s32.totalorder %s22, 1
      %p213 = por %p211, %p212
      %p214 = scmp.ne.s32.totalorder %s203, %s204
      %p215 = scmp.eq.s32.totalorder %s22, 0
      %p216 = por %p214, %p215
      %p217 = scmp.ne.s32.totalorder %s203, %s204
      %p218 = scmp.eq.s32.totalorder %s23, 1
      %p219 = por %p217, %p218
      %p221 = scmp.ne.s32.totalorder %s204, %s220
      %p222 = scmp.eq.s32.totalorder %s23, 0
      %p223 = por %p221, %p222
      %p224 = scmp.le.s32.totalorder 1, %s17
      %p225 = scmp.lt.s32.totalorder %s17, 3
      %p226 = pnand %p224, %p225
      %p227 = pneg %p226
      // Predicated region
      $region9: #{tpu_custom_call.1} parent=5 // pred_check
        _
      $region10: #{tpu_custom_call.1} parent=5 // pred_check_branch
        %229 = sbr.rel (%p226) target = $region12
      $region11: #{tpu_custom_call.1} parent=5 // pred_region
        %s230 = ssub.s32 %s17, 1
        // Predicated region
        $region13: #{tpu_custom_call.1} parent=11 // pred_check
          %p231 = pneg %p104
        $region14: #{tpu_custom_call.1} parent=11 // pred_check_branch
          %233 = sbr.rel (%p231) target = $region16
        $region15: #{tpu_custom_call.1} parent=11 // pred_region
          _
        $region16: #{tpu_custom_call.1} parent=11 // pred_fallthru
          _
        // Predicated region
        $region17: #{tpu_custom_call.1} parent=11 // pred_check
          %p234 = pneg %p125
        $region18: #{tpu_custom_call.1} parent=11 // pred_check_branch
          %236 = sbr.rel (%p234) target = $region20
        $region19: #{tpu_custom_call.1} parent=11 // pred_region
          _
        $region20: #{tpu_custom_call.1} parent=11 // pred_fallthru
          _
        // Predicated region
        $region21: #{tpu_custom_call.1} parent=11 // pred_check
          %p237 = pneg %p146
        $region22: #{tpu_custom_call.1} parent=11 // pred_check_branch
          %239 = sbr.rel (%p237) target = $region24
        $region23: #{tpu_custom_call.1} parent=11 // pred_region
          _
        $region24: #{tpu_custom_call.1} parent=11 // pred_fallthru
          _
        // Predicated region
        $region25: #{tpu_custom_call.1} parent=11 // pred_check
          %p240 = pneg %p167
        $region26: #{tpu_custom_call.1} parent=11 // pred_check_branch
          %242 = sbr.rel (%p240) target = $region28
        $region27: #{tpu_custom_call.1} parent=11 // pred_region
          _
        $region28: #{tpu_custom_call.1} parent=11 // pred_fallthru
          _
        // Predicated region
        $region29: #{tpu_custom_call.1} parent=11 // pred_check
          %p243 = pneg %p188
        $region30: #{tpu_custom_call.1} parent=11 // pred_check_branch
          %245 = sbr.rel (%p243) target = $region32
        $region31: #{tpu_custom_call.1} parent=11 // pred_region
          _
        $region32: #{tpu_custom_call.1} parent=11 // pred_fallthru
          _
      $region12: #{tpu_custom_call.1} parent=5 // pred_fallthru
        _
      %p246 = scmp.lt.s32.totalorder %s17, 2
      // Predicated region
      $region33: #{tpu_custom_call.1} parent=5 // pred_check
        %p247 = pneg %p246
      $region34: #{tpu_custom_call.1} parent=5 // pred_check_branch
        %249 = sbr.rel (%p247) target = $region36
      $region35: #{tpu_custom_call.1} parent=5 // pred_region
        // Predicated region
        $region37: #{tpu_custom_call.1} parent=35 // pred_check
          %p250 = pneg %p51
        $region38: #{tpu_custom_call.1} parent=35 // pred_check_branch
          %252 = sbr.rel (%p250) target = $region40
        $region39: #{tpu_custom_call.1} parent=35 // pred_region
          %p253 = scmp.lt.s32.totalorder %s24, 1
          %s254 = scalar_select %p253, %s24, 1
          %p255 = scmp.lt.s32.totalorder %s25, 0
          %s256 = scalar_select %p255, %s25, 0
          %s257 = sadd.s32 %s256, %s254
          %s258 = smul.addr %s257, 8
          %s259 = scalar_lea.vmem %s0, %s258
        $region40: #{tpu_custom_call.1} parent=35 // pred_fallthru
          _
        // Predicated region
        $region41: #{tpu_custom_call.1} parent=35 // pred_check
          %p260 = pneg %p77
        $region42: #{tpu_custom_call.1} parent=35 // pred_check_branch
          %262 = sbr.rel (%p260) target = $region44
        $region43: #{tpu_custom_call.1} parent=35 // pred_region
          %p263 = scmp.lt.s32.totalorder %s24, 1
          %s264 = scalar_select %p263, %s24, 1
          %s265 = smul.addr %s264, 8
          %s266 = scalar_lea.vmem %s1, %s265
        $region44: #{tpu_custom_call.1} parent=35 // pred_fallthru
          _
      $region36: #{tpu_custom_call.1} parent=5 // pred_fallthru
        _
      %p267 = scmp.le.s32.totalorder 1, %s17
      %p268 = scmp.lt.s32.totalorder %s17, 3
      %p269 = pnand %p267, %p268
      %p270 = pneg %p269
      // Predicated region
      $region45: #{tpu_custom_call.1} parent=5 // pred_check
        _
      $region46: #{tpu_custom_call.1} parent=5 // pred_check_branch
        %272 = sbr.rel (%p269) target = $region48
      $region47: #{tpu_custom_call.1} parent=5 // pred_region
        %s273 = ssub.s32 %s17, 1
        %p274 = scmp.lt.s32.totalorder %s26, 1
        %s275 = scalar_select %p274, %s26, 1
        %p276 = scmp.lt.s32.totalorder %s27, 0
        %s277 = scalar_select %p276, %s27, 0
        %s278 = sadd.s32 %s277, %s275
        %s279 = smul.addr %s278, 8
        %s280 = scalar_lea.vmem %s0, %s279
        %p281 = pneg %p57
        %p282 = pneg %p54
        %p283 = scmp.lt.s32.totalorder %s26, 1
        %s284 = scalar_select %p283, %s26, 1
        %s285 = smul.addr %s284, 8
        %s286 = scalar_lea.vmem %s1, %s285
        %p287 = pneg %p83
        %p288 = pneg %p80
        %p289 = pneg %p104
        %p290 = pneg %p101
        %p291 = pneg %p125
        %p292 = pneg %p122
        %p293 = pneg %p146
        %p294 = pneg %p143
        %p295 = pneg %p167
        %p296 = pneg %p164
        %p297 = pneg %p188
        %p298 = pneg %p185
        %p299 = pneg %p216
        %p300 = pneg %p213
        %s301 = sand.u32 %s203, 1
        %s302 = scalar_lea.sflag [#allocation4], %s301
        %s303 = sand.u32 %s203, 1
        %s304 = smul.addr %s303, 8
        %s305 = scalar_lea.vmem [#allocation3], %s304
        %p306 = scmp.lt.s32.totalorder %s26, 1
        %s307 = scalar_select %p306, %s26, 1
        %p308 = scmp.lt.s32.totalorder %s27, 0
        %s309 = scalar_select %p308, %s27, 0
        %s310 = sadd.s32 %s309, %s307
        %s311 = smul.addr %s310, 8
        %s312 = scalar_lea.vmem %s0, %s311
        %p313 = scmp.lt.s32.totalorder %s26, 1
        %s314 = scalar_select %p313, %s26, 1
        %s315 = smul.addr %s314, 8
        %s316 = scalar_lea.vmem %s1, %s315
        %v318 = vld [vmem:[%s312] sm:$0xff]
        %v319 = vld [vmem:[%s316] sm:$0xff]
        %v320 = vld [vmem:[%s2] sm:$0xf]
        %v321 = vld [vmem:[%s3] sm:$0xf]
        %323 = vset.pattern.permute.xlu0 0
        %324 = vperm.xlu0 %323, %v321
        %v325 = vpop.permute.xlu0 %324
        %vm327 = vcmask 64512
        %v329 = vsel %vm327, %v320, 0
        %331 = vmatprep.subr.mxu0 0.0
        %332 = vmatpush1.msra.mxu0 0.0
        %333 = vmatprep.subr.mxu0 0.0
        %334 = vmatpush1.msra.mxu0 0.0
        %335 = vmatprep.subr.mxu0 0.0
        %336 = vmatpush1.msra.mxu0 0.0
        %337 = vmatprep.subr.mxu0 0.0
        %338 = vmatpush1.msra.mxu0 0.0
        %339 = vmatprep.subr.mxu0 0.0
        %340 = vmatpush1.msra.mxu0 0.0
        %341 = vmatprep.subr.mxu0 0.0
        %342 = vmatpush1.msra.mxu0 0.0
        %343 = vmatprep.subr.mxu0 0.0
        %344 = vmatpush1.msra.mxu0 0.0
        %345 = vmatprep.subr.mxu0 0.0
        %346 = vmatpush1.msra.mxu0 0.0
        %347 = vmatprep.subr.mxu0 0.0
        %348 = vmatpush1.msra.mxu0 0.0
        %349 = vmatprep.subr.mxu0 0.0
        %350 = vmatpush1.msra.mxu0 0.0
        %351 = vmatprep.subr.mxu0 0.0
        %352 = vmatpush1.msra.mxu0 0.0
        %353 = vmatprep.subr.mxu0 0.0
        %354 = vmatpush1.msra.mxu0 0.0
        %355 = vmatprep.subr.mxu0 0.0
        %356 = vmatpush1.msra.mxu0 0.0
        %357 = vmatprep.subr.mxu0 0.0
        %358 = vmatpush1.msra.mxu0 0.0
        %359 = vmatprep.subr.mxu0 0.0
        %360 = vmatpush1.msra.mxu0 0.0
        %361 = vmatprep.subr.mxu0 0.0
        %362 = vmatpush1.msra.mxu0 %v318
        %363 = vmatprep.subr.mxu0 0.0
        %364 = vmatpush2.msra.mxu0 0.0
        %365 = vmatprep.subr.mxu0 0.0
        %366 = vmatpush2.msra.mxu0 0.0
        %367 = vmatprep.subr.mxu0 0.0
        %368 = vmatpush2.msra.mxu0 0.0
        %369 = vmatprep.subr.mxu0 0.0
        %370 = vmatpush2.msra.mxu0 0.0
        %371 = vmatprep.subr.mxu0 0.0
        %372 = vmatpush2.msra.mxu0 0.0
        %373 = vmatprep.subr.mxu0 0.0
        %374 = vmatpush2.msra.mxu0 0.0
        %375 = vmatprep.subr.mxu0 0.0
        %376 = vmatpush2.msra.mxu0 0.0
        %377 = vmatprep.subr.mxu0 0.0
        %378 = vmatpush2.msra.mxu0 0.0
        %379 = vmatprep.subr.mxu0 0.0
        %380 = vmatpush2.msra.mxu0 0.0
        %381 = vmatprep.subr.mxu0 0.0
        %382 = vmatpush2.msra.mxu0 0.0
        %383 = vmatprep.subr.mxu0 0.0
        %384 = vmatpush2.msra.mxu0 0.0
        %385 = vmatprep.subr.mxu0 0.0
        %386 = vmatpush2.msra.mxu0 0.0
        %387 = vmatprep.subr.mxu0 0.0
        %388 = vmatpush2.msra.mxu0 0.0
        %389 = vmatprep.subr.mxu0 0.0
        %390 = vmatpush2.msra.mxu0 0.0
        %391 = vmatprep.subr.mxu0 0.0
        %392 = vmatpush2.msra.mxu0 0.0
        %393 = vmatprep.subr.mxu0 0.0
        %394 = vmatpush2.msra.mxu0 0.0
        %395 = vmatprep.mubr.f32.mxu0 0.0
        %396 = vmatmul.mubr.f32.gmra.mxu0 %v329
        %v397 = vpop.f32.mrf.mxu0
        %v398 = vadd.f32 %v325, %v397
        %v399 = vpop.f32.mrf.mxu0
        %400 = vdwg.mxu0
        %v401 = vld [vmem:[%s4] sm:$0xff]
        %v402 = vld [vmem:[%s4 + $0x8] sm:$0xf]
        %v403 = vld [vmem:[%s5] sm:$0xff]
        %v404 = vld [vmem:[%s5 + $0x8] sm:$0xf]
        %406 = vset.pattern.permute.xlu0 0
        %407 = vperm.xlu0 %406, %v403
        %v408 = vpop.permute.xlu0 %407
        %411 = vset.pattern.permute.xlu0 0
        %412 = vperm.xlu0 %411, %v404
        %v413 = vpop.permute.xlu0 %412
        %v416 = vsel %vm327, %v401, 0
        %v419 = vsel %vm327, %v402, 0
        %421 = vmatprep.subr.mxu0 0.0
        %422 = vmatpush1.msra.mxu0 0.0
        %423 = vmatprep.subr.mxu0 0.0
        %424 = vmatpush1.msra.mxu0 0.0
        %425 = vmatprep.subr.mxu0 0.0
        %426 = vmatpush1.msra.mxu0 0.0
        %427 = vmatprep.subr.mxu0 0.0
        %428 = vmatpush1.msra.mxu0 0.0
        %429 = vmatprep.subr.mxu0 0.0
        %430 = vmatpush1.msra.mxu0 0.0
        %431 = vmatprep.subr.mxu0 0.0
        %432 = vmatpush1.msra.mxu0 0.0
        %433 = vmatprep.subr.mxu0 0.0
        %434 = vmatpush1.msra.mxu0 0.0
        %435 = vmatprep.subr.mxu0 0.0
        %436 = vmatpush1.msra.mxu0 0.0
        %437 = vmatprep.subr.mxu0 0.0
        %438 = vmatpush1.msra.mxu0 0.0
        %439 = vmatprep.subr.mxu0 0.0
        %440 = vmatpush1.msra.mxu0 0.0
        %441 = vmatprep.subr.mxu0 0.0
        %442 = vmatpush1.msra.mxu0 0.0
        %443 = vmatprep.subr.mxu0 0.0
        %444 = vmatpush1.msra.mxu0 0.0
        %445 = vmatprep.subr.mxu0 0.0
        %446 = vmatpush1.msra.mxu0 0.0
        %447 = vmatprep.subr.mxu0 0.0
        %448 = vmatpush1.msra.mxu0 0.0
        %449 = vmatprep.subr.mxu0 0.0
        %450 = vmatpush1.msra.mxu0 0.0
        %451 = vmatprep.subr.mxu0 0.0
        %452 = vmatpush1.msra.mxu0 %v319
        %453 = vmatprep.subr.mxu0 0.0
        %454 = vmatpush2.msra.mxu0 0.0
        %455 = vmatprep.subr.mxu0 0.0
        %456 = vmatpush2.msra.mxu0 0.0
        %457 = vmatprep.subr.mxu0 0.0
        %458 = vmatpush2.msra.mxu0 0.0
        %459 = vmatprep.subr.mxu0 0.0
        %460 = vmatpush2.msra.mxu0 0.0
        %461 = vmatprep.subr.mxu0 0.0
        %462 = vmatpush2.msra.mxu0 0.0
        %463 = vmatprep.subr.mxu0 0.0
        %464 = vmatpush2.msra.mxu0 0.0
        %465 = vmatprep.subr.mxu0 0.0
        %466 = vmatpush2.msra.mxu0 0.0
        %467 = vmatprep.subr.mxu0 0.0
        %468 = vmatpush2.msra.mxu0 0.0
        %469 = vmatprep.subr.mxu0 0.0
        %470 = vmatpush2.msra.mxu0 0.0
        %471 = vmatprep.subr.mxu0 0.0
        %472 = vmatpush2.msra.mxu0 0.0
        %473 = vmatprep.subr.mxu0 0.0
        %474 = vmatpush2.msra.mxu0 0.0
        %475 = vmatprep.subr.mxu0 0.0
        %476 = vmatpush2.msra.mxu0 0.0
        %477 = vmatprep.subr.mxu0 0.0
        %478 = vmatpush2.msra.mxu0 0.0
        %479 = vmatprep.subr.mxu0 0.0
        %480 = vmatpush2.msra.mxu0 0.0
        %481 = vmatprep.subr.mxu0 0.0
        %482 = vmatpush2.msra.mxu0 0.0
        %483 = vmatprep.subr.mxu0 0.0
        %484 = vmatpush2.msra.mxu0 0.0
        %485 = vmatprep.mubr.f32.mxu0 0.0
        %486 = vmatmul.mubr.f32.gmra.mxu0 %v416
        %v487 = vpop.f32.mrf.mxu0
        %v488 = vadd.f32 %v408, %v487
        %v489 = vpop.f32.mrf.mxu0
        %490 = vmatprep.mubr.f32.mxu0 0.0
        %491 = vmatmul.mubr.f32.gmra.mxu0 %v419
        %v492 = vpop.f32.mrf.mxu0
        %v493 = vadd.f32 %v413, %v492
        %v494 = vpop.f32.mrf.mxu0
        %495 = vdwg.mxu0
        %v496 = vpack.c.bf16 %v493, %v493
        %v497 = vpack.c.bf16 %v398, %v398
        %498 = vxpose.xlu0.c.b16.start [1/8] %v496, 128
        %499 = vxpose.xlu0.c.b16.cont [2/8] 0, 128
        %500 = vxpose.xlu0.c.b16.cont [3/8] 0, 128
        %501 = vxpose.xlu0.c.b16.cont [4/8] 0, 128
        %502 = vxpose.xlu0.c.b16.cont [5/8] 0, 128
        %503 = vxpose.xlu0.c.b16.cont [6/8] 0, 128
        %504 = vxpose.xlu0.c.b16.cont [7/8] 0, 128
        %505 = vxpose.xlu0.c.b16.end [8/8] 0, 128
        %v506 = vpop.trf.xlu0
        %v507 = vpop.trf.xlu0
        %v508 = vpop.trf.xlu0
        %v509 = vpop.trf.xlu0
        %v510 = vpop.trf.xlu0
        %v511 = vpop.trf.xlu0
        %v512 = vpop.trf.xlu0
        %v513 = vpop.trf.xlu0
        %vm514 = vcmask 31744
        %v516 = vsel %vm514, %v506, 0
        %v519 = vsel %vm514, %v507, 0
        %v522 = vsel %vm514, %v508, 0
        %v525 = vsel %vm514, %v509, 0
        %vm527 = vcmask 1041408
        %v529 = vsel %vm527, %v497, 0
        %531 = vmatprep.subr.bf16.mxu0 0
        %532 = vmatpush1.bf16.msra.mxu0 0
        %533 = vmatprep.subr.bf16.mxu0 0
        %534 = vmatpush1.bf16.msra.mxu0 0
        %535 = vmatprep.subr.bf16.mxu0 0
        %536 = vmatpush1.bf16.msra.mxu0 0
        %537 = vmatprep.subr.bf16.mxu0 0
        %538 = vmatpush1.bf16.msra.mxu0 0
        %539 = vmatprep.subr.bf16.mxu0 0
        %540 = vmatpush1.bf16.msra.mxu0 0
        %541 = vmatprep.subr.bf16.mxu0 0
        %542 = vmatpush1.bf16.msra.mxu0 0
        %543 = vmatprep.subr.bf16.mxu0 0
        %544 = vmatpush1.bf16.msra.mxu0 0
        %545 = vmatprep.subr.bf16.mxu0 0
        %546 = vmatpush1.bf16.msra.mxu0 %v529
        %547 = vmatprep.subr.bf16.mxu0 0
        %548 = vmatpush2.bf16.msra.mxu0 0
        %549 = vmatprep.subr.bf16.mxu0 0
        %550 = vmatpush2.bf16.msra.mxu0 0
        %551 = vmatprep.subr.bf16.mxu0 0
        %552 = vmatpush2.bf16.msra.mxu0 0
        %553 = vmatprep.subr.bf16.mxu0 0
        %554 = vmatpush2.bf16.msra.mxu0 0
        %555 = vmatprep.subr.bf16.mxu0 0
        %556 = vmatpush2.bf16.msra.mxu0 0
        %557 = vmatprep.subr.bf16.mxu0 0
        %558 = vmatpush2.bf16.msra.mxu0 0
        %559 = vmatprep.subr.bf16.mxu0 0
        %560 = vmatpush2.bf16.msra.mxu0 0
        %561 = vmatprep.subr.bf16.mxu0 0
        %562 = vmatpush2.bf16.msra.mxu0 0
        %563 = vmatprep.mubr.bf16.mxu0 0
        %564 = vmatmul.mubr.bf16.gmra.mxu0 %v516
        %v565 = vpop.f32.mrf.mxu0
        %v566 = vadd.f32 0.0, %v565
        %v567 = vpop.f32.mrf.mxu0
        %v568 = vpop.f32.mrf.mxu0
        %v569 = vadd.f32 0.0, %v568
        %v570 = vpop.f32.mrf.mxu0
        %571 = vmatprep.mubr.bf16.mxu0 0
        %572 = vmatmul.mubr.bf16.gmra.mxu0 %v519
        %v573 = vpop.f32.mrf.mxu0
        %v574 = vadd.f32 0.0, %v573
        %v575 = vpop.f32.mrf.mxu0
        %v576 = vpop.f32.mrf.mxu0
        %v577 = vadd.f32 0.0, %v576
        %v578 = vpop.f32.mrf.mxu0
        %579 = vmatprep.mubr.bf16.mxu0 0
        %580 = vmatmul.mubr.bf16.gmra.mxu0 %v522
        %v581 = vpop.f32.mrf.mxu0
        %v582 = vadd.f32 0.0, %v581
        %v583 = vpop.f32.mrf.mxu0
        %v584 = vpop.f32.mrf.mxu0
        %v585 = vadd.f32 0.0, %v584
        %v586 = vpop.f32.mrf.mxu0
        %587 = vmatprep.mubr.bf16.mxu0 0
        %588 = vmatmul.mubr.bf16.gmra.mxu0 %v525
        %v589 = vpop.f32.mrf.mxu0
        %v590 = vadd.f32 0.0, %v589
        %v591 = vpop.f32.mrf.mxu0
        %v592 = vpop.f32.mrf.mxu0
        %v593 = vadd.f32 0.0, %v592
        %v594 = vpop.f32.mrf.mxu0
        %595 = vdwg.mxu0
        %vm596 = vcmask 523264
        %v597 = vsel %vm596, %v566, -inf
        %v598 = vsel %vm596, %v569, -inf
        %v599 = vsel %vm596, %v574, -inf
        %v600 = vsel %vm596, %v577, -inf
        %v601 = vsel %vm596, %v582, -inf
        %v602 = vmax.f32 %v597, %v601
        %v603 = vsel %vm596, %v585, -inf
        %v604 = vmax.f32 %v598, %v603
        %v605 = vsel %vm596, %v590, -inf
        %v606 = vmax.f32 %v599, %v605
        %v607 = vsel %vm596, %v593, -inf
        %v608 = vmax.f32 %v600, %v607
        %v609 = vmax.f32 %v602, %v604
        %v610 = vmax.f32 %v606, %v608
        %v611 = vmax.f32 %v609, %v610
        %v612 = vrot.slane %v611, 4
        %v613 = vmax.f32 %v611, %v612
        %v614 = vrot.slane %v613, 2
        %v615 = vmax.f32 %v613, %v614
        %v616 = vrot.slane %v615, 1
        %v617 = vmax.f32 %v615, %v616
        %v618 = vsub.f32 %v566, %v617
        %v619 = vsub.f32 %v569, %v617
        %v620 = vsub.f32 %v574, %v617
        %v621 = vsub.f32 %v577, %v617
        %v622 = vsub.f32 %v582, %v617
        %v623 = vsub.f32 %v585, %v617
        %v624 = vsub.f32 %v590, %v617
        %v625 = vsub.f32 %v593, %v617
        %v626 = vmul.f32 %v618, 1.442695
        %v627 = vpow.pop %v626
        %v628 = vmul.f32 %v619, 1.442695
        %v629 = vpow.pop %v628
        %v630 = vmul.f32 %v620, 1.442695
        %v631 = vpow.pop %v630
        %v632 = vmul.f32 %v621, 1.442695
        %v633 = vpow.pop %v632
        %v634 = vmul.f32 %v622, 1.442695
        %v635 = vpow.pop %v634
        %v636 = vmul.f32 %v623, 1.442695
        %v637 = vpow.pop %v636
        %v638 = vmul.f32 %v624, 1.442695
        %v639 = vpow.pop %v638
        %v640 = vmul.f32 %v625, 1.442695
        %v641 = vpow.pop %v640
        %v642 = vsel %vm596, %v627, 0.0
        %v643 = vsel %vm596, %v629, 0.0
        %v644 = vadd.f32 %v642, %v643
        %v645 = vsel %vm596, %v631, 0.0
        %v646 = vadd.f32 %v644, %v645
        %v647 = vsel %vm596, %v633, 0.0
        %v648 = vadd.f32 %v646, %v647
        %v649 = vsel %vm596, %v635, 0.0
        %v650 = vadd.f32 %v648, %v649
        %v651 = vsel %vm596, %v637, 0.0
        %v652 = vadd.f32 %v650, %v651
        %v653 = vsel %vm596, %v639, 0.0
        %v654 = vadd.f32 %v652, %v653
        %v655 = vsel %vm596, %v641, 0.0
        %v656 = vadd.f32 %v654, %v655
        %v657 = vrot.slane %v656, 4
        %v658 = vadd.f32 %v656, %v657
        %v659 = vrot.slane %v658, 2
        %v660 = vadd.f32 %v658, %v659
        %v661 = vrot.slane %v660, 1
        %v662 = vadd.f32 %v660, %v661
        %v663 = vpack.c.bf16 %v488, %v488
        %v664 = vpack.c.bf16 %v629, %v627
        %v665 = vpack.c.bf16 %v633, %v631
        %v666 = vpack.c.bf16 %v637, %v635
        %v667 = vpack.c.bf16 %v641, %v639
        %v669 = vsel %vm596, %v663, 0
        %671 = vmatprep.subr.bf16.mxu0 0
        %672 = vmatpush1.bf16.msra.mxu0 0
        %673 = vmatprep.subr.bf16.mxu0 0
        %674 = vmatpush1.bf16.msra.mxu0 0
        %675 = vmatprep.subr.bf16.mxu0 0
        %676 = vmatpush1.bf16.msra.mxu0 0
        %677 = vmatprep.subr.bf16.mxu0 0
        %678 = vmatpush1.bf16.msra.mxu0 0
        %679 = vmatprep.subr.bf16.mxu0 0
        %680 = vmatpush1.bf16.msra.mxu0 %v667
        %681 = vmatprep.subr.bf16.mxu0 0
        %682 = vmatpush1.bf16.msra.mxu0 %v666
        %683 = vmatprep.subr.bf16.mxu0 0
        %684 = vmatpush1.bf16.msra.mxu0 %v665
        %685 = vmatprep.subr.bf16.mxu0 0
        %686 = vmatpush1.bf16.msra.mxu0 %v664
        %687 = vmatprep.subr.bf16.mxu0 0
        %688 = vmatpush2.bf16.msra.mxu0 0
        %689 = vmatprep.subr.bf16.mxu0 0
        %690 = vmatpush2.bf16.msra.mxu0 0
        %691 = vmatprep.subr.bf16.mxu0 0
        %692 = vmatpush2.bf16.msra.mxu0 0
        %693 = vmatprep.subr.bf16.mxu0 0
        %694 = vmatpush2.bf16.msra.mxu0 0
        %695 = vmatprep.subr.bf16.mxu0 0
        %696 = vmatpush2.bf16.msra.mxu0 0
        %697 = vmatprep.subr.bf16.mxu0 0
        %698 = vmatpush2.bf16.msra.mxu0 0
        %699 = vmatprep.subr.bf16.mxu0 0
        %700 = vmatpush2.bf16.msra.mxu0 0
        %701 = vmatprep.subr.bf16.mxu0 0
        %702 = vmatpush2.bf16.msra.mxu0 0
        %703 = vmatprep.mubr.bf16.mxu0 0
        %704 = vmatmul.mubr.bf16.gmra.mxu0 %v669
        %v705 = vpop.f32.mrf.mxu0
        %v706 = vadd.f32 0.0, %v705
        %v707 = vpop.f32.mrf.mxu0
        %v708 = vpop.f32.mrf.mxu0
        %v709 = vpop.f32.mrf.mxu0
        %710 = vdwg.mxu0
        %v711 = vrcp.pop %v662
        %s712 = sld [smem:[#allocation2]]
        %v713 = vmul.f32 %v706, %v711
        %v714 = vstv %s712
        %v715 = vmul.f32 %v714, %v713
        %v716 = vadd.f32 %v715, %v318
        %717 = vst.msk [vmem:[%s305] sm:$0xff] %vm596, %v716
        %s718 = sand.u32 %s203, 1
        %s719 = scalar_lea.sflag [#allocation4], %s718
        %s720 = sand.u32 %s203, 1
        %s721 = smul.addr %s720, 8
        %s722 = scalar_lea.vmem [#allocation3], %s721
        // Predicated region
        $region49: #{tpu_custom_call.1} parent=47 // pred_check
          %p723 = pneg %p213
        $region50: #{tpu_custom_call.1} parent=47 // pred_check_branch
          %725 = sbr.rel (%p723) target = $region52
        $region51: #{tpu_custom_call.1} parent=47 // pred_region
          %s727 = ssub.s32 128, 128
          %728 = vsyncadd %s719, %s727
          %s729 = sadd.s32 %s27, %s26
          %s730 = smul.addr %s729, 128
          %s731 = scalar_lea.hbm %s7, %s730
          %s733 = sshll.u32 %s722, 4
          %s734 = int_to_ptr.vmem [resolvable:$true] %s733
          %736 = dma.vmem_to_hbm [thread:$0]  %s734, 128, %s731, %s719
        $region52: #{tpu_custom_call.1} parent=47 // pred_fallthru
          _
      $region48: #{tpu_custom_call.1} parent=5 // pred_fallthru
        _
      %p737 = scmp.le.s32.totalorder 2, %s17
      // Predicated region
      $region53: #{tpu_custom_call.1} parent=5 // pred_check
        %p738 = pneg %p737
      $region54: #{tpu_custom_call.1} parent=5 // pred_check_branch
        %740 = sbr.rel (%p738) target = $region56
      $region55: #{tpu_custom_call.1} parent=5 // pred_region
        %s741 = ssub.s32 %s17, 2
        // Predicated region
        $region57: #{tpu_custom_call.1} parent=55 // pred_check
          %p742 = pneg %p219
        $region58: #{tpu_custom_call.1} parent=55 // pred_check_branch
          %744 = sbr.rel (%p742) target = $region60
        $region59: #{tpu_custom_call.1} parent=55 // pred_region
          %s745 = sand.u32 %s204, 1
          %s746 = scalar_lea.sflag [#allocation4], %s745
          %s747 = sand.u32 %s204, 1
          %s748 = smul.addr %s747, 8
          %s749 = scalar_lea.vmem [#allocation3], %s748
          %750 = dma.done %s746, 128
        $region60: #{tpu_custom_call.1} parent=55 // pred_fallthru
          _
      $region56: #{tpu_custom_call.1} parent=5 // pred_fallthru
        _
    $region6: #{tpu_custom_call.1} parent=1 // loop_footer
      %s21 = sadd.s32 1, %s17
    $region7: #{tpu_custom_call.1} parent=1 // loop_footer_branch
      %16 = sbr.rel target = $region3
    $region8: #{tpu_custom_call.1} parent=1 // loop_exit
      _
    %751 = vsyncpa [#allocation4], 1
    %s752 = scalar_lea.sflag [#allocation4], 1
    %753 = vsyncpa %s752, 1

</llo_original>
